<compile_context>
chip_gen: v6e
topology: v6e:2x2x1
jax: 0.10.0
libtpu: 0.0.40
codegen_flags: <defaults>
</compile_context>

<pallas_src>
import jax
import jax.numpy as jnp
from jax.experimental import pallas as pl
from jax.experimental.pallas import tpu as pltpu

LANE = 128


def _round_up(n, m):
    return ((n + m - 1) // m) * m


def _make_kernel(B, HW):
    def kernel(patches_ref, wc_ref, bc_ref, w1_ref, b1_ref, w2_ref, b2_ref, out_ref):
        # patches_ref: (B*HW, K_pad) bf16 -- im2col rows of ALL batch elements fused.
        # --- encoder: conv-as-matmul + bias + ReLU + per-image global average pool ---
        conv = jnp.dot(patches_ref[...], wc_ref[...],
                       preferred_element_type=jnp.float32)           # (B*HW, F_pad) f32
        conv = jnp.maximum(conv + bc_ref[...], 0.0)                   # lane-dense VPU ops
        feat = jnp.mean(conv.reshape(B, HW, conv.shape[-1]), axis=1)  # (B, F_pad)

        # --- head: fc1 -> ReLU -> dropout (eval: identity) -> fc2 ---
        h = jnp.dot(feat.astype(jnp.bfloat16), w1_ref[...],
                    preferred_element_type=jnp.float32) + b1_ref[...]
        h = jnp.maximum(h, 0.0)
        # TODO(synk): nn.Dropout is identity in eval mode; training-mode masking
        # (pltpu.prng_seed + pltpu.stateful_bernoulli) is omitted to match inference.
        out = jnp.dot(h.astype(jnp.bfloat16), w2_ref[...],
                      preferred_element_type=jnp.float32) + b2_ref[...]
        out_ref[...] = out                                            # (B, NC_pad) lane-dense
    return kernel


def im2col_3x3(x_nhwc):
    """Extract 3x3, stride-1, pad-1 patches. (B,H,W,C) -> (B, H*W, 9*C).
    NOTE: at ResNet-scale H,W (v5e HBM-bound) this should become 9 accumulated
    matmuls over shifted slices of a padded VMEM tile to avoid 9x activation
    traffic; at these toy shapes the im2col bytes are negligible."""
    B, H, W, C = x_nhwc.shape
    xp = jnp.pad(x_nhwc, ((0, 0), (1, 1), (1, 1), (0, 0)))
    cols = [xp[:, di:di + H, dj:dj + W, :] for di in range(3) for dj in range(3)]
    patches = jnp.concatenate(cols, axis=-1)             # (B, H, W, 9*C)
    return patches.reshape(B, H * W, 9 * C)


def image_model_forward(x_nchw, packed):
    """Forward pass. x_nchw: (B, C, H, W) float32 -> (B, num_classes) logits."""
    wc, bc, w1, b1, w2, b2 = (packed["wc"], packed["bc"], packed["w1"],
                              packed["b1"], packed["w2"], packed["b2"])
    num_classes = packed["num_classes"]
    B, C, H, W = x_nchw.shape
    HW = H * W
    K = 9 * C
    K_pad, F_pad = wc.shape
    hidden_pad = w1.shape[1]
    nc_pad = w2.shape[1]

    # Layout plumbing (wrapper side): NCHW -> NHWC -> im2col -> pad K -> fuse batch rows.
    x_nhwc = jnp.transpose(x_nchw, (0, 2, 3, 1))
    patches = im2col_3x3(x_nhwc)                                      # (B, HW, K) f32
    patches = jnp.pad(patches, ((0, 0), (0, 0), (0, K_pad - K)))
    patches = patches.reshape(B * HW, K_pad).astype(jnp.bfloat16)     # (B*HW, K_pad)

    full = lambda i: (0, 0)
    out_padded = pl.pallas_call(
        _make_kernel(B, HW),
        out_shape=jax.ShapeDtypeStruct((B, nc_pad), jnp.float32),
        grid_spec=pltpu.PrefetchScalarGridSpec(
            num_scalar_prefetch=0,
            grid=(1,),                                   # single step: batch fused into rows
            in_specs=[
                pl.BlockSpec((B * HW, K_pad), full),     # im2col patches (all images, bf16)
                pl.BlockSpec((K_pad, F_pad), full),      # conv weight  (padded, bf16)
                pl.BlockSpec((1, F_pad), full),          # conv bias    (padded, f32)
                pl.BlockSpec((F_pad, hidden_pad), full), # fc1 weight   (padded, bf16)
                pl.BlockSpec((1, hidden_pad), full),     # fc1 bias     (padded, f32)
                pl.BlockSpec((hidden_pad, nc_pad), full),# fc2 weight   (padded, bf16)
                pl.BlockSpec((1, nc_pad), full),         # fc2 bias     (padded, f32)
            ],
            out_specs=pl.BlockSpec((B, nc_pad), full),   # one lane-dense output slab
        ),
        compiler_params=pltpu.CompilerParams(
            dimension_semantics=("arbitrary",)),         # tiny workload: keep on one core
    )(patches, wc, bc, w1, b1, w2, b2)
    return out_padded[:, :num_classes]


def init_params(key, in_channels, feature_size, hidden_size, num_classes):
    """Logical (unpadded) f32 parameters; conv weight is (9*C, F) in (kh, kw, c) order
    to match im2col_3x3."""
    k1, k2, k3, k4, k5, k6 = jax.random.split(key, 6)
    K = 9 * in_channels
    wc = jax.random.normal(k1, (K, feature_size), jnp.float32) * (1.0 / jnp.sqrt(K))
    bc = jax.random.normal(k2, (1, feature_size), jnp.float32) * 0.01
    w1 = jax.random.normal(k3, (feature_size, hidden_size), jnp.float32) * (
        1.0 / jnp.sqrt(feature_size))
    b1 = jax.random.normal(k4, (1, hidden_size), jnp.float32) * 0.01
    w2 = jax.random.normal(k5, (hidden_size, num_classes), jnp.float32) * (
        1.0 / jnp.sqrt(hidden_size))
    b2 = jax.random.normal(k6, (1, num_classes), jnp.float32) * 0.01
    return {"wc": wc, "bc": bc, "w1": w1, "b1": b1, "w2": w2, "b2": b2}


def pack_params(params):
    """One-time host-side packing: zero-pad feature dims to 128 lanes (K to 32) and
    cast matmul weights to bf16; biases stay f32 (added to f32 accumulators)."""
    wc, bc, w1, b1, w2, b2 = (params["wc"], params["bc"], params["w1"],
                              params["b1"], params["w2"], params["b2"])
    K, F = wc.shape
    hidden = w1.shape[1]
    nc = w2.shape[1]
    K_pad = _round_up(K, 32)
    F_pad = _round_up(F, LANE)
    hidden_pad = _round_up(hidden, LANE)
    nc_pad = _round_up(nc, LANE)

    def pad2(a, rows, cols):
        return jnp.pad(a, ((0, rows - a.shape[0]), (0, cols - a.shape[1])))

    return {
        "wc": pad2(wc, K_pad, F_pad).astype(jnp.bfloat16),
        "bc": pad2(bc, 1, F_pad),
        "w1": pad2(w1, F_pad, hidden_pad).astype(jnp.bfloat16),
        "b1": pad2(b1, 1, hidden_pad),
        "w2": pad2(w2, hidden_pad, nc_pad).astype(jnp.bfloat16),
        "b2": pad2(b2, 1, nc_pad),
        "num_classes": nc,
    }


def reference_forward(x_nchw, params):
    """Pure-JAX reference mirroring the kernel math (bf16 inputs, f32 accumulation)."""
    bf = jnp.bfloat16
    x_nhwc = jnp.transpose(x_nchw, (0, 2, 3, 1))
    patches = im2col_3x3(x_nhwc).astype(bf)                               # (B, HW, K)
    conv = jnp.einsum("bpk,kf->bpf", patches, params["wc"].astype(bf),
                      preferred_element_type=jnp.float32) + params["bc"]
    conv = jnp.maximum(conv, 0.0)
    feat = jnp.mean(conv, axis=1)                                         # (B, F)
    h = jnp.maximum(
        jnp.dot(feat.astype(bf), params["w1"].astype(bf),
                preferred_element_type=jnp.float32) + params["b1"], 0.0)
    return jnp.dot(h.astype(bf), params["w2"].astype(bf),
                   preferred_element_type=jnp.float32) + params["b2"]


if __name__ == "__main__":
    # Small shapes consistent with the module: batch=2, 3-channel 16x16 images,
    # synthetic encoder feature_size=8, classifier hidden=32, num_classes=10.
    B, C, H, W = 2, 3, 16, 16
    feature_size, hidden_size, num_classes = 8, 32, 10

    key = jax.random.PRNGKey(0)
    kx, kp = jax.random.split(key)
    x = jax.random.normal(kx, (B, C, H, W), jnp.float32)
    params = init_params(kp, C, feature_size, hidden_size, num_classes)
    packed = pack_params(params)

    out = image_model_forward(x, packed)
    out = jax.block_until_ready(out)

    ref = reference_forward(x, params)
    assert out.shape == (B, num_classes)
    assert jnp.allclose(out, ref, atol=1e-2, rtol=1e-2), "mismatch vs reference"

    print("KERNEL_OK")
</pallas_src>

<mosaic_0001>
module attributes {stable_mosaic.version = 11 : i64} {
  func.func @kernel(%arg0: i32, %arg1: memref<512x32xbf16, #tpu.memory_space<vmem>>, %arg2: memref<32x128xbf16, #tpu.memory_space<vmem>>, %arg3: memref<1x128xf32, #tpu.memory_space<vmem>>, %arg4: memref<128x128xbf16, #tpu.memory_space<vmem>>, %arg5: memref<1x128xf32, #tpu.memory_space<vmem>>, %arg6: memref<128x128xbf16, #tpu.memory_space<vmem>>, %arg7: memref<1x128xf32, #tpu.memory_space<vmem>>, %arg8: memref<2x128xf32, #tpu.memory_space<vmem>>) attributes {dimension_semantics = [#tpu.dimension_semantics<arbitrary>], iteration_bounds = array<i64: 1>, scalar_prefetch = 0 : i64, scratch_operands = 0 : i64, tpu.core_type = #tpu.core_type<tc>, window_params = [{pipeline_mode = #tpu.pipeline_mode<synchronous>, transform_indices = @transform_0, window_bounds = array<i64: 512, 32>}, {pipeline_mode = #tpu.pipeline_mode<synchronous>, transform_indices = @transform_1, window_bounds = array<i64: 32, 128>}, {pipeline_mode = #tpu.pipeline_mode<synchronous>, transform_indices = @transform_2, window_bounds = array<i64: 1, 128>}, {pipeline_mode = #tpu.pipeline_mode<synchronous>, transform_indices = @transform_3, window_bounds = array<i64: 128, 128>}, {pipeline_mode = #tpu.pipeline_mode<synchronous>, transform_indices = @transform_4, window_bounds = array<i64: 1, 128>}, {pipeline_mode = #tpu.pipeline_mode<synchronous>, transform_indices = @transform_5, window_bounds = array<i64: 128, 128>}, {pipeline_mode = #tpu.pipeline_mode<synchronous>, transform_indices = @transform_6, window_bounds = array<i64: 1, 128>}, {pipeline_mode = #tpu.pipeline_mode<synchronous>, transform_indices = @transform_7, window_bounds = array<i64: 2, 128>}]} {
    %c0 = arith.constant 0 : index
    %c0_0 = arith.constant 0 : index
    %0 = vector.load %arg1[%c0, %c0_0] : memref<512x32xbf16, #tpu.memory_space<vmem>>, vector<512x32xbf16>
    %c0_1 = arith.constant 0 : index
    %c0_2 = arith.constant 0 : index
    %1 = vector.load %arg2[%c0_1, %c0_2] : memref<32x128xbf16, #tpu.memory_space<vmem>>, vector<32x128xbf16>
    %cst = arith.constant dense<0.000000e+00> : vector<512x128xf32>
    %2 = tpu.matmul %0, %1, %cst {dimension_numbers = #tpu.dot_dimension_numbers<[1], [0], [0], [1], [0, 0, 1, 1], [], []>} : vector<512x32xbf16>, vector<32x128xbf16>, vector<512x128xf32> -> vector<512x128xf32>
    %c0_3 = arith.constant 0 : index
    %c0_4 = arith.constant 0 : index
    %3 = vector.load %arg3[%c0_3, %c0_4] : memref<1x128xf32, #tpu.memory_space<vmem>>, vector<1x128xf32>
    %4 = vector.broadcast %3 : vector<1x128xf32> to vector<512x128xf32>
    %5 = arith.addf %2, %4 : vector<512x128xf32>
    %cst_5 = arith.constant 0.000000e+00 : f32
    %6 = vector.broadcast %cst_5 : f32 to vector<512x128xf32>
    %7 = arith.maximumf %5, %6 : vector<512x128xf32>
    %8 = vector.shape_cast %7 : vector<512x128xf32> to vector<2x256x128xf32>
    %cst_6 = arith.constant dense<0.000000e+00> : vector<2x128xf32>
    %9 = vector.multi_reduction <add>, %8, %cst_6 [1] : vector<2x256x128xf32> to vector<2x128xf32>
    %cst_7 = arith.constant 2.560000e+02 : f32
    %10 = vector.broadcast %cst_7 : f32 to vector<2x128xf32>
    %11 = arith.divf %9, %10 : vector<2x128xf32>
    %12 = arith.truncf %11 : vector<2x128xf32> to vector<2x128xbf16>
    %c0_8 = arith.constant 0 : index
    %c0_9 = arith.constant 0 : index
    %13 = vector.load %arg4[%c0_8, %c0_9] : memref<128x128xbf16, #tpu.memory_space<vmem>>, vector<128x128xbf16>
    %cst_10 = arith.constant dense<0.000000e+00> : vector<2x128xf32>
    %14 = tpu.matmul %12, %13, %cst_10 {dimension_numbers = #tpu.dot_dimension_numbers<[1], [0], [0], [1], [0, 0, 1, 1], [], []>} : vector<2x128xbf16>, vector<128x128xbf16>, vector<2x128xf32> -> vector<2x128xf32>
    %c0_11 = arith.constant 0 : index
    %c0_12 = arith.constant 0 : index
    %15 = vector.load %arg5[%c0_11, %c0_12] : memref<1x128xf32, #tpu.memory_space<vmem>>, vector<1x128xf32>
    %16 = vector.broadcast %15 : vector<1x128xf32> to vector<2x128xf32>
    %17 = arith.addf %14, %16 : vector<2x128xf32>
    %cst_13 = arith.constant 0.000000e+00 : f32
    %18 = vector.broadcast %cst_13 : f32 to vector<2x128xf32>
    %19 = arith.maximumf %17, %18 : vector<2x128xf32>
    %20 = arith.truncf %19 : vector<2x128xf32> to vector<2x128xbf16>
    %c0_14 = arith.constant 0 : index
    %c0_15 = arith.constant 0 : index
    %21 = vector.load %arg6[%c0_14, %c0_15] : memref<128x128xbf16, #tpu.memory_space<vmem>>, vector<128x128xbf16>
    %cst_16 = arith.constant dense<0.000000e+00> : vector<2x128xf32>
    %22 = tpu.matmul %20, %21, %cst_16 {dimension_numbers = #tpu.dot_dimension_numbers<[1], [0], [0], [1], [0, 0, 1, 1], [], []>} : vector<2x128xbf16>, vector<128x128xbf16>, vector<2x128xf32> -> vector<2x128xf32>
    %c0_17 = arith.constant 0 : index
    %c0_18 = arith.constant 0 : index
    %23 = vector.load %arg7[%c0_17, %c0_18] : memref<1x128xf32, #tpu.memory_space<vmem>>, vector<1x128xf32>
    %24 = vector.broadcast %23 : vector<1x128xf32> to vector<2x128xf32>
    %25 = arith.addf %22, %24 : vector<2x128xf32>
    %c0_19 = arith.constant 0 : index
    %c0_20 = arith.constant 0 : index
    %26 = vector.load %arg8[%c0_19, %c0_20] : memref<2x128xf32, #tpu.memory_space<vmem>>, vector<2x128xf32>
    tpu.vector_store %arg8[%c0_19, %c0_20], %25 {strides = array<i32>} : memref<2x128xf32, #tpu.memory_space<vmem>>, vector<2x128xf32>,
    return
  }
  func.func @transform_0(%arg0: i32) -> (i32, i32) {
    %c0_i32 = arith.constant 0 : i32
    %c0_i32_0 = arith.constant 0 : i32
    %c0_i32_1 = arith.constant 0 : i32
    return %c0_i32, %c0_i32_0 : i32, i32
  }
  func.func @transform_1(%arg0: i32) -> (i32, i32) {
    %c0_i32 = arith.constant 0 : i32
    %c0_i32_0 = arith.constant 0 : i32
    %c0_i32_1 = arith.constant 0 : i32
    return %c0_i32, %c0_i32_0 : i32, i32
  }
  func.func @transform_2(%arg0: i32) -> (i32, i32) {
    %c0_i32 = arith.constant 0 : i32
    %c0_i32_0 = arith.constant 0 : i32
    %c0_i32_1 = arith.constant 0 : i32
    return %c0_i32, %c0_i32_0 : i32, i32
  }
  func.func @transform_3(%arg0: i32) -> (i32, i32) {
    %c0_i32 = arith.constant 0 : i32
    %c0_i32_0 = arith.constant 0 : i32
    %c0_i32_1 = arith.constant 0 : i32
    return %c0_i32, %c0_i32_0 : i32, i32
  }
  func.func @transform_4(%arg0: i32) -> (i32, i32) {
    %c0_i32 = arith.constant 0 : i32
    %c0_i32_0 = arith.constant 0 : i32
    %c0_i32_1 = arith.constant 0 : i32
    return %c0_i32, %c0_i32_0 : i32, i32
  }
  func.func @transform_5(%arg0: i32) -> (i32, i32) {
    %c0_i32 = arith.constant 0 : i32
    %c0_i32_0 = arith.constant 0 : i32
    %c0_i32_1 = arith.constant 0 : i32
    return %c0_i32, %c0_i32_0 : i32, i32
  }
  func.func @transform_6(%arg0: i32) -> (i32, i32) {
    %c0_i32 = arith.constant 0 : i32
    %c0_i32_0 = arith.constant 0 : i32
    %c0_i32_1 = arith.constant 0 : i32
    return %c0_i32, %c0_i32_0 : i32, i32
  }
  func.func @transform_7(%arg0: i32) -> (i32, i32) {
    %c0_i32 = arith.constant 0 : i32
    %c0_i32_0 = arith.constant 0 : i32
    %c0_i32_1 = arith.constant 0 : i32
    return %c0_i32, %c0_i32_0 : i32, i32
  }
}

</mosaic_0001>

<llo_original>
// kernel: tpu_custom_call.1
$region0: #{tpu_custom_call.1}
  #allocation0 [shape = 'u32[]', space=smem, size = 0x4, offset = 0x4, fixed_abs, tag = 'smem constant byte address 0x4 - core index']
  #allocation1 [shape = 'u32[144,128]{1,0:T(1,128)}', space=vmem, size = 0x12000, scoped, tag = 'internal scratch']
  %s0 = inlined_call_operand.vmem [shape: bf16[512,32], index: 0, kind: input, shape index: {}]
  %s1 = inlined_call_operand.vmem [shape: bf16[32,128], index: 1, kind: input, shape index: {}]
  %s2 = inlined_call_operand.vmem [shape: f32[1,128], index: 2, kind: input, shape index: {}]
  %s3 = inlined_call_operand.vmem [shape: bf16[128,128], index: 3, kind: input, shape index: {}]
  %s4 = inlined_call_operand.vmem [shape: f32[1,128], index: 4, kind: input, shape index: {}]
  %s5 = inlined_call_operand.vmem [shape: bf16[128,128], index: 5, kind: input, shape index: {}]
  %s6 = inlined_call_operand.vmem [shape: f32[1,128], index: 6, kind: input, shape index: {}]
  %s7 = inlined_call_operand.hbm [shape: f32[2,128], index: 7, kind: output, shape index: {}]
  %s8 = sld [smem:[#allocation0]]
  $region38: #{tpu_custom_call.1} parent=0
    _
  %s10 = ssub.s32 1, %s8
  %s11 = scalar_select 0, %s10, %s8
  $region1: #{tpu_custom_call.1} parent=0
    #allocation2 [shape = 'u8[1024]{0}', space=vmem, size = 0x400, scoped, tag = 'output window, operand 0, single buffered']
    #allocation3 [shape = 's32[1]{0}', space=sflag, size = 0x4, scoped, tag = 'scoped memory for tpu_custom_call.1']
    %12 = vsyncpa [#allocation3], 0
    // Predicated region
    $region2: #{tpu_custom_call.1} parent=1 // pred_check
      _
    $region3: #{tpu_custom_call.1} parent=1 // pred_check_branch
      %14 = sbr.rel (0) target = $region5
    $region4: #{tpu_custom_call.1} parent=1 // pred_region
      _
    $region5: #{tpu_custom_call.1} parent=1 // pred_fallthru
      _
    // Predicated region
    $region6: #{tpu_custom_call.1} parent=1 // pred_check
      _
    $region7: #{tpu_custom_call.1} parent=1 // pred_check_branch
      %16 = sbr.rel (0) target = $region9
    $region8: #{tpu_custom_call.1} parent=1 // pred_region
      _
    $region9: #{tpu_custom_call.1} parent=1 // pred_fallthru
      _
    // Predicated region
    $region10: #{tpu_custom_call.1} parent=1 // pred_check
      _
    $region11: #{tpu_custom_call.1} parent=1 // pred_check_branch
      %18 = sbr.rel (0) target = $region13
    $region12: #{tpu_custom_call.1} parent=1 // pred_region
      _
    $region13: #{tpu_custom_call.1} parent=1 // pred_fallthru
      _
    // Predicated region
    $region14: #{tpu_custom_call.1} parent=1 // pred_check
      _
    $region15: #{tpu_custom_call.1} parent=1 // pred_check_branch
      %20 = sbr.rel (0) target = $region17
    $region16: #{tpu_custom_call.1} parent=1 // pred_region
      _
    $region17: #{tpu_custom_call.1} parent=1 // pred_fallthru
      _
    // Predicated region
    $region18: #{tpu_custom_call.1} parent=1 // pred_check
      _
    $region19: #{tpu_custom_call.1} parent=1 // pred_check_branch
      %22 = sbr.rel (0) target = $region21
    $region20: #{tpu_custom_call.1} parent=1 // pred_region
      _
    $region21: #{tpu_custom_call.1} parent=1 // pred_fallthru
      _
    // Predicated region
    $region22: #{tpu_custom_call.1} parent=1 // pred_check
      _
    $region23: #{tpu_custom_call.1} parent=1 // pred_check_branch
      %24 = sbr.rel (0) target = $region25
    $region24: #{tpu_custom_call.1} parent=1 // pred_region
      _
    $region25: #{tpu_custom_call.1} parent=1 // pred_fallthru
      _
    // Predicated region
    $region26: #{tpu_custom_call.1} parent=1 // pred_check
      _
    $region27: #{tpu_custom_call.1} parent=1 // pred_check_branch
      %26 = sbr.rel (0) target = $region29
    $region28: #{tpu_custom_call.1} parent=1 // pred_region
      _
    $region29: #{tpu_custom_call.1} parent=1 // pred_fallthru
      _
    %v28 = vld [vmem:[%s0] sm:$0xf]
    %v29 = vld [vmem:[%s0 + $0x4] sm:$0xf]
    %v30 = vld [vmem:[%s0 + $0x8] sm:$0xf]
    %v31 = vld [vmem:[%s0 + $0xc] sm:$0xf]
    %v32 = vld [vmem:[%s0 + $0x10] sm:$0xf]
    %v33 = vld [vmem:[%s0 + $0x14] sm:$0xf]
    %v34 = vld [vmem:[%s0 + $0x18] sm:$0xf]
    %v35 = vld [vmem:[%s0 + $0x1c] sm:$0xf]
    %v36 = vld [vmem:[%s0 + $0x20] sm:$0xf]
    %v37 = vld [vmem:[%s0 + $0x24] sm:$0xf]
    %v38 = vld [vmem:[%s0 + $0x28] sm:$0xf]
    %v39 = vld [vmem:[%s0 + $0x2c] sm:$0xf]
    %v40 = vld [vmem:[%s0 + $0x30] sm:$0xf]
    %v41 = vld [vmem:[%s0 + $0x34] sm:$0xf]
    %v42 = vld [vmem:[%s0 + $0x38] sm:$0xf]
    %v43 = vld [vmem:[%s0 + $0x3c] sm:$0xf]
    %v44 = vld [vmem:[%s0 + $0x40] sm:$0xf]
    %v45 = vld [vmem:[%s0 + $0x44] sm:$0xf]
    %v46 = vld [vmem:[%s0 + $0x48] sm:$0xf]
    %v47 = vld [vmem:[%s0 + $0x4c] sm:$0xf]
    %v48 = vld [vmem:[%s0 + $0x50] sm:$0xf]
    %v49 = vld [vmem:[%s0 + $0x54] sm:$0xf]
    %v50 = vld [vmem:[%s0 + $0x58] sm:$0xf]
    %v51 = vld [vmem:[%s0 + $0x5c] sm:$0xf]
    %v52 = vld [vmem:[%s0 + $0x60] sm:$0xf]
    %v53 = vld [vmem:[%s0 + $0x64] sm:$0xf]
    %v54 = vld [vmem:[%s0 + $0x68] sm:$0xf]
    %v55 = vld [vmem:[%s0 + $0x6c] sm:$0xf]
    %v56 = vld [vmem:[%s0 + $0x70] sm:$0xf]
    %v57 = vld [vmem:[%s0 + $0x74] sm:$0xf]
    %v58 = vld [vmem:[%s0 + $0x78] sm:$0xf]
    %v59 = vld [vmem:[%s0 + $0x7c] sm:$0xf]
    %v60 = vld [vmem:[%s0 + $0x80] sm:$0xf]
    %v61 = vld [vmem:[%s0 + $0x84] sm:$0xf]
    %v62 = vld [vmem:[%s0 + $0x88] sm:$0xf]
    %v63 = vld [vmem:[%s0 + $0x8c] sm:$0xf]
    %v64 = vld [vmem:[%s0 + $0x90] sm:$0xf]
    %v65 = vld [vmem:[%s0 + $0x94] sm:$0xf]
    %v66 = vld [vmem:[%s0 + $0x98] sm:$0xf]
    %v67 = vld [vmem:[%s0 + $0x9c] sm:$0xf]
    %v68 = vld [vmem:[%s0 + $0xa0] sm:$0xf]
    %v69 = vld [vmem:[%s0 + $0xa4] sm:$0xf]
    %v70 = vld [vmem:[%s0 + $0xa8] sm:$0xf]
    %v71 = vld [vmem:[%s0 + $0xac] sm:$0xf]
    %v72 = vld [vmem:[%s0 + $0xb0] sm:$0xf]
    %v73 = vld [vmem:[%s0 + $0xb4] sm:$0xf]
    %v74 = vld [vmem:[%s0 + $0xb8] sm:$0xf]
    %v75 = vld [vmem:[%s0 + $0xbc] sm:$0xf]
    %v76 = vld [vmem:[%s0 + $0xc0] sm:$0xf]
    %v77 = vld [vmem:[%s0 + $0xc4] sm:$0xf]
    %v78 = vld [vmem:[%s0 + $0xc8] sm:$0xf]
    %v79 = vld [vmem:[%s0 + $0xcc] sm:$0xf]
    %v80 = vld [vmem:[%s0 + $0xd0] sm:$0xf]
    %v81 = vld [vmem:[%s0 + $0xd4] sm:$0xf]
    %v82 = vld [vmem:[%s0 + $0xd8] sm:$0xf]
    %v83 = vld [vmem:[%s0 + $0xdc] sm:$0xf]
    %v84 = vld [vmem:[%s0 + $0xe0] sm:$0xf]
    %v85 = vld [vmem:[%s0 + $0xe4] sm:$0xf]
    %v86 = vld [vmem:[%s0 + $0xe8] sm:$0xf]
    %v87 = vld [vmem:[%s0 + $0xec] sm:$0xf]
    %v88 = vld [vmem:[%s0 + $0xf0] sm:$0xf]
    %v89 = vld [vmem:[%s0 + $0xf4] sm:$0xf]
    %v90 = vld [vmem:[%s0 + $0xf8] sm:$0xf]
    %v91 = vld [vmem:[%s0 + $0xfc] sm:$0xf]
    %v92 = vld [vmem:[%s1] sm:$0xf]
    %v93 = vld [vmem:[%s1 + $0x4] sm:$0xf]
    %v94 = vld [vmem:[%s1 + $0x8] sm:$0xf]
    %v95 = vld [vmem:[%s1 + $0xc] sm:$0xf]
    %v96 = vld [vmem:[%s2] sm:$0x1]
    %v98 = vlaneseq
    %v99 = vshrl.u32 %v98, 7
    %v100 = vsub.s32 0, %v99
    %v101 = vrot.slane %v96, %v100
    %v167 = vunpack.c.l.b16 %v28
    %v168 = vunpack.c.l.b16 %v29
    %v169 = vunpack.c.l.b16 %v30
    %v170 = vunpack.c.l.b16 %v31
    %v171 = vunpack.c.l.b16 %v32
    %v172 = vunpack.c.l.b16 %v33
    %v173 = vunpack.c.l.b16 %v34
    %v174 = vunpack.c.l.b16 %v35
    %v175 = vunpack.c.l.b16 %v36
    %v176 = vunpack.c.l.b16 %v37
    %v177 = vunpack.c.l.b16 %v38
    %v178 = vunpack.c.l.b16 %v39
    %v179 = vunpack.c.l.b16 %v40
    %v180 = vunpack.c.l.b16 %v41
    %v181 = vunpack.c.l.b16 %v42
    %v182 = vunpack.c.l.b16 %v43
    %v183 = vunpack.c.l.b16 %v44
    %v184 = vunpack.c.l.b16 %v45
    %v185 = vunpack.c.l.b16 %v46
    %v186 = vunpack.c.l.b16 %v47
    %v187 = vunpack.c.l.b16 %v48
    %v188 = vunpack.c.l.b16 %v49
    %v189 = vunpack.c.l.b16 %v50
    %v190 = vunpack.c.l.b16 %v51
    %v191 = vunpack.c.l.b16 %v52
    %v192 = vunpack.c.l.b16 %v53
    %v193 = vunpack.c.l.b16 %v54
    %v194 = vunpack.c.l.b16 %v55
    %v195 = vunpack.c.l.b16 %v56
    %v196 = vunpack.c.l.b16 %v57
    %v197 = vunpack.c.l.b16 %v58
    %v198 = vunpack.c.l.b16 %v59
    %v199 = vunpack.c.l.b16 %v60
    %v200 = vunpack.c.l.b16 %v61
    %v201 = vunpack.c.l.b16 %v62
    %v202 = vunpack.c.l.b16 %v63
    %v203 = vunpack.c.l.b16 %v64
    %v204 = vunpack.c.l.b16 %v65
    %v205 = vunpack.c.l.b16 %v66
    %v206 = vunpack.c.l.b16 %v67
    %v207 = vunpack.c.l.b16 %v68
    %v208 = vunpack.c.l.b16 %v69
    %v209 = vunpack.c.l.b16 %v70
    %v210 = vunpack.c.l.b16 %v71
    %v211 = vunpack.c.l.b16 %v72
    %v212 = vunpack.c.l.b16 %v73
    %v213 = vunpack.c.l.b16 %v74
    %v214 = vunpack.c.l.b16 %v75
    %v215 = vunpack.c.l.b16 %v76
    %v216 = vunpack.c.l.b16 %v77
    %v217 = vunpack.c.l.b16 %v78
    %v218 = vunpack.c.l.b16 %v79
    %v219 = vunpack.c.l.b16 %v80
    %v220 = vunpack.c.l.b16 %v81
    %v221 = vunpack.c.l.b16 %v82
    %v222 = vunpack.c.l.b16 %v83
    %v223 = vunpack.c.l.b16 %v84
    %v224 = vunpack.c.l.b16 %v85
    %v225 = vunpack.c.l.b16 %v86
    %v226 = vunpack.c.l.b16 %v87
    %v227 = vunpack.c.l.b16 %v88
    %v228 = vunpack.c.l.b16 %v89
    %v229 = vunpack.c.l.b16 %v90
    %v230 = vunpack.c.l.b16 %v91
    %v231 = vpack.c.b16 %v168, %v167
    %v232 = vpack.c.b16 %v170, %v169
    %v233 = vpack.c.b16 %v172, %v171
    %v234 = vpack.c.b16 %v174, %v173
    %v235 = vpack.c.b16 %v176, %v175
    %v236 = vpack.c.b16 %v178, %v177
    %v237 = vpack.c.b16 %v180, %v179
    %v238 = vpack.c.b16 %v182, %v181
    %v239 = vpack.c.b16 %v184, %v183
    %v240 = vpack.c.b16 %v186, %v185
    %v241 = vpack.c.b16 %v188, %v187
    %v242 = vpack.c.b16 %v190, %v189
    %v243 = vpack.c.b16 %v192, %v191
    %v244 = vpack.c.b16 %v194, %v193
    %v245 = vpack.c.b16 %v196, %v195
    %v246 = vpack.c.b16 %v198, %v197
    %v247 = vpack.c.b16 %v200, %v199
    %v248 = vpack.c.b16 %v202, %v201
    %v249 = vpack.c.b16 %v204, %v203
    %v250 = vpack.c.b16 %v206, %v205
    %v251 = vpack.c.b16 %v208, %v207
    %v252 = vpack.c.b16 %v210, %v209
    %v253 = vpack.c.b16 %v212, %v211
    %v254 = vpack.c.b16 %v214, %v213
    %v255 = vpack.c.b16 %v216, %v215
    %v256 = vpack.c.b16 %v218, %v217
    %v257 = vpack.c.b16 %v220, %v219
    %v258 = vpack.c.b16 %v222, %v221
    %v259 = vpack.c.b16 %v224, %v223
    %v260 = vpack.c.b16 %v226, %v225
    %v261 = vpack.c.b16 %v228, %v227
    %v262 = vpack.c.b16 %v230, %v229
    %v267 = vunpack.c.l.b16 %v92
    %v268 = vunpack.c.l.b16 %v93
    %v269 = vunpack.c.l.b16 %v94
    %v270 = vunpack.c.l.b16 %v95
    %v271 = vpack.c.b16 %v268, %v267
    %v272 = vpack.c.b16 %v270, %v269
    %vm275 = vcmask 261120
    %v277 = vsel %vm275, %v231, 0
    %v280 = vsel %vm275, %v232, 0
    %v283 = vsel %vm275, %v233, 0
    %v286 = vsel %vm275, %v234, 0
    %v289 = vsel %vm275, %v235, 0
    %v292 = vsel %vm275, %v236, 0
    %v295 = vsel %vm275, %v237, 0
    %v298 = vsel %vm275, %v238, 0
    %v301 = vsel %vm275, %v239, 0
    %v304 = vsel %vm275, %v240, 0
    %v307 = vsel %vm275, %v241, 0
    %v310 = vsel %vm275, %v242, 0
    %v313 = vsel %vm275, %v243, 0
    %v316 = vsel %vm275, %v244, 0
    %v319 = vsel %vm275, %v245, 0
    %v322 = vsel %vm275, %v246, 0
    %v325 = vsel %vm275, %v247, 0
    %v328 = vsel %vm275, %v248, 0
    %v331 = vsel %vm275, %v249, 0
    %v334 = vsel %vm275, %v250, 0
    %v337 = vsel %vm275, %v251, 0
    %v340 = vsel %vm275, %v252, 0
    %v343 = vsel %vm275, %v253, 0
    %v346 = vsel %vm275, %v254, 0
    %v349 = vsel %vm275, %v255, 0
    %v352 = vsel %vm275, %v256, 0
    %v355 = vsel %vm275, %v257, 0
    %v358 = vsel %vm275, %v258, 0
    %v361 = vsel %vm275, %v259, 0
    %v364 = vsel %vm275, %v260, 0
    %v367 = vsel %vm275, %v261, 0
    %v370 = vsel %vm275, %v262, 0
    %372 = vmatprep.subr.bf16.mxu0 0
    %373 = vmatpush1.bf16.msra.mxu0 0
    %374 = vmatprep.subr.bf16.mxu0 0
    %375 = vmatpush1.bf16.msra.mxu0 0
    %376 = vmatprep.subr.bf16.mxu0 0
    %377 = vmatpush1.bf16.msra.mxu0 0
    %378 = vmatprep.subr.bf16.mxu0 0
    %379 = vmatpush1.bf16.msra.mxu0 0
    %380 = vmatprep.subr.bf16.mxu0 0
    %381 = vmatpush1.bf16.msra.mxu0 0
    %382 = vmatprep.subr.bf16.mxu0 0
    %383 = vmatpush1.bf16.msra.mxu0 0
    %384 = vmatprep.subr.bf16.mxu0 0
    %385 = vmatpush1.bf16.msra.mxu0 %v272
    %386 = vmatprep.subr.bf16.mxu0 0
    %387 = vmatpush1.bf16.msra.mxu0 %v271
    %388 = vmatprep.subr.bf16.mxu0 0
    %389 = vmatpush2.bf16.msra.mxu0 0
    %390 = vmatprep.subr.bf16.mxu0 0
    %391 = vmatpush2.bf16.msra.mxu0 0
    %392 = vmatprep.subr.bf16.mxu0 0
    %393 = vmatpush2.bf16.msra.mxu0 0
    %394 = vmatprep.subr.bf16.mxu0 0
    %395 = vmatpush2.bf16.msra.mxu0 0
    %396 = vmatprep.subr.bf16.mxu0 0
    %397 = vmatpush2.bf16.msra.mxu0 0
    %398 = vmatprep.subr.bf16.mxu0 0
    %399 = vmatpush2.bf16.msra.mxu0 0
    %400 = vmatprep.subr.bf16.mxu0 0
    %401 = vmatpush2.bf16.msra.mxu0 0
    %402 = vmatprep.subr.bf16.mxu0 0
    %403 = vmatpush2.bf16.msra.mxu0 0
    %404 = vmatprep.mubr.bf16.mxu0 0
    %405 = vmatmul.mubr.bf16.gmra.mxu0 %v277
    %v406 = vpop.f32.mrf.mxu0
    %v407 = vadd.f32 %v101, %v406
    %v408 = vpop.f32.mrf.mxu0
    %v409 = vpop.f32.mrf.mxu0
    %v410 = vadd.f32 %v101, %v409
    %v411 = vpop.f32.mrf.mxu0
    %412 = vmatprep.mubr.bf16.mxu0 0
    %413 = vmatmul.mubr.bf16.gmra.mxu0 %v280
    %v414 = vpop.f32.mrf.mxu0
    %v415 = vadd.f32 %v101, %v414
    %v416 = vpop.f32.mrf.mxu0
    %v417 = vpop.f32.mrf.mxu0
    %v418 = vadd.f32 %v101, %v417
    %v419 = vpop.f32.mrf.mxu0
    %420 = vmatprep.mubr.bf16.mxu0 0
    %421 = vmatmul.mubr.bf16.gmra.mxu0 %v283
    %v422 = vpop.f32.mrf.mxu0
    %v423 = vadd.f32 %v101, %v422
    %v424 = vpop.f32.mrf.mxu0
    %v425 = vpop.f32.mrf.mxu0
    %v426 = vadd.f32 %v101, %v425
    %v427 = vpop.f32.mrf.mxu0
    %428 = vmatprep.mubr.bf16.mxu0 0
    %429 = vmatmul.mubr.bf16.gmra.mxu0 %v286
    %v430 = vpop.f32.mrf.mxu0
    %v431 = vadd.f32 %v101, %v430
    %v432 = vpop.f32.mrf.mxu0
    %v433 = vpop.f32.mrf.mxu0
    %v434 = vadd.f32 %v101, %v433
    %v435 = vpop.f32.mrf.mxu0
    %436 = vmatprep.mubr.bf16.mxu0 0
    %437 = vmatmul.mubr.bf16.gmra.mxu0 %v289
    %v438 = vpop.f32.mrf.mxu0
    %v439 = vadd.f32 %v101, %v438
    %v440 = vpop.f32.mrf.mxu0
    %v441 = vpop.f32.mrf.mxu0
    %v442 = vadd.f32 %v101, %v441
    %v443 = vpop.f32.mrf.mxu0
    %444 = vmatprep.mubr.bf16.mxu0 0
    %445 = vmatmul.mubr.bf16.gmra.mxu0 %v292
    %v446 = vpop.f32.mrf.mxu0
    %v447 = vadd.f32 %v101, %v446
    %v448 = vpop.f32.mrf.mxu0
    %v449 = vpop.f32.mrf.mxu0
    %v450 = vadd.f32 %v101, %v449
    %v451 = vpop.f32.mrf.mxu0
    %452 = vmatprep.mubr.bf16.mxu0 0
    %453 = vmatmul.mubr.bf16.gmra.mxu0 %v295
    %v454 = vpop.f32.mrf.mxu0
    %v455 = vadd.f32 %v101, %v454
    %v456 = vpop.f32.mrf.mxu0
    %v457 = vpop.f32.mrf.mxu0
    %v458 = vadd.f32 %v101, %v457
    %v459 = vpop.f32.mrf.mxu0
    %460 = vmatprep.mubr.bf16.mxu0 0
    %461 = vmatmul.mubr.bf16.gmra.mxu0 %v298
    %v462 = vpop.f32.mrf.mxu0
    %v463 = vadd.f32 %v101, %v462
    %v464 = vpop.f32.mrf.mxu0
    %v465 = vpop.f32.mrf.mxu0
    %v466 = vadd.f32 %v101, %v465
    %v467 = vpop.f32.mrf.mxu0
    %468 = vmatprep.mubr.bf16.mxu0 0
    %469 = vmatmul.mubr.bf16.gmra.mxu0 %v301
    %v470 = vpop.f32.mrf.mxu0
    %v471 = vadd.f32 %v101, %v470
    %v472 = vpop.f32.mrf.mxu0
    %v473 = vpop.f32.mrf.mxu0
    %v474 = vadd.f32 %v101, %v473
    %v475 = vpop.f32.mrf.mxu0
    %476 = vmatprep.mubr.bf16.mxu0 0
    %477 = vmatmul.mubr.bf16.gmra.mxu0 %v304
    %v478 = vpop.f32.mrf.mxu0
    %v479 = vadd.f32 %v101, %v478
    %v480 = vpop.f32.mrf.mxu0
    %v481 = vpop.f32.mrf.mxu0
    %v482 = vadd.f32 %v101, %v481
    %v483 = vpop.f32.mrf.mxu0
    %484 = vmatprep.mubr.bf16.mxu0 0
    %485 = vmatmul.mubr.bf16.gmra.mxu0 %v307
    %v486 = vpop.f32.mrf.mxu0
    %v487 = vadd.f32 %v101, %v486
    %v488 = vpop.f32.mrf.mxu0
    %v489 = vpop.f32.mrf.mxu0
    %v490 = vadd.f32 %v101, %v489
    %v491 = vpop.f32.mrf.mxu0
    %492 = vmatprep.mubr.bf16.mxu0 0
    %493 = vmatmul.mubr.bf16.gmra.mxu0 %v310
    %v494 = vpop.f32.mrf.mxu0
    %v495 = vadd.f32 %v101, %v494
    %v496 = vpop.f32.mrf.mxu0
    %v497 = vpop.f32.mrf.mxu0
    %v498 = vadd.f32 %v101, %v497
    %v499 = vpop.f32.mrf.mxu0
    %500 = vmatprep.mubr.bf16.mxu0 0
    %501 = vmatmul.mubr.bf16.gmra.mxu0 %v313
    %v502 = vpop.f32.mrf.mxu0
    %v503 = vadd.f32 %v101, %v502
    %v504 = vpop.f32.mrf.mxu0
    %v505 = vpop.f32.mrf.mxu0
    %v506 = vadd.f32 %v101, %v505
    %v507 = vpop.f32.mrf.mxu0
    %508 = vmatprep.mubr.bf16.mxu0 0
    %509 = vmatmul.mubr.bf16.gmra.mxu0 %v316
    %v510 = vpop.f32.mrf.mxu0
    %v511 = vadd.f32 %v101, %v510
    %v512 = vpop.f32.mrf.mxu0
    %v513 = vpop.f32.mrf.mxu0
    %v514 = vadd.f32 %v101, %v513
    %v515 = vpop.f32.mrf.mxu0
    %516 = vmatprep.mubr.bf16.mxu0 0
    %517 = vmatmul.mubr.bf16.gmra.mxu0 %v319
    %v518 = vpop.f32.mrf.mxu0
    %v519 = vadd.f32 %v101, %v518
    %v520 = vpop.f32.mrf.mxu0
    %v521 = vpop.f32.mrf.mxu0
    %v522 = vadd.f32 %v101, %v521
    %v523 = vpop.f32.mrf.mxu0
    %524 = vmatprep.mubr.bf16.mxu0 0
    %525 = vmatmul.mubr.bf16.gmra.mxu0 %v322
    %v526 = vpop.f32.mrf.mxu0
    %v527 = vadd.f32 %v101, %v526
    %v528 = vpop.f32.mrf.mxu0
    %v529 = vpop.f32.mrf.mxu0
    %v530 = vadd.f32 %v101, %v529
    %v531 = vpop.f32.mrf.mxu0
    %532 = vmatprep.mubr.bf16.mxu0 0
    %533 = vmatmul.mubr.bf16.gmra.mxu0 %v325
    %v534 = vpop.f32.mrf.mxu0
    %v535 = vadd.f32 %v101, %v534
    %v536 = vpop.f32.mrf.mxu0
    %v537 = vpop.f32.mrf.mxu0
    %v538 = vadd.f32 %v101, %v537
    %v539 = vpop.f32.mrf.mxu0
    %540 = vmatprep.mubr.bf16.mxu0 0
    %541 = vmatmul.mubr.bf16.gmra.mxu0 %v328
    %v542 = vpop.f32.mrf.mxu0
    %v543 = vadd.f32 %v101, %v542
    %v544 = vpop.f32.mrf.mxu0
    %v545 = vpop.f32.mrf.mxu0
    %v546 = vadd.f32 %v101, %v545
    %v547 = vpop.f32.mrf.mxu0
    %548 = vmatprep.mubr.bf16.mxu0 0
    %549 = vmatmul.mubr.bf16.gmra.mxu0 %v331
    %v550 = vpop.f32.mrf.mxu0
    %v551 = vadd.f32 %v101, %v550
    %v552 = vpop.f32.mrf.mxu0
    %v553 = vpop.f32.mrf.mxu0
    %v554 = vadd.f32 %v101, %v553
    %v555 = vpop.f32.mrf.mxu0
    %556 = vmatprep.mubr.bf16.mxu0 0
    %557 = vmatmul.mubr.bf16.gmra.mxu0 %v334
    %v558 = vpop.f32.mrf.mxu0
    %v559 = vadd.f32 %v101, %v558
    %v560 = vpop.f32.mrf.mxu0
    %v561 = vpop.f32.mrf.mxu0
    %v562 = vadd.f32 %v101, %v561
    %v563 = vpop.f32.mrf.mxu0
    %564 = vmatprep.mubr.bf16.mxu0 0
    %565 = vmatmul.mubr.bf16.gmra.mxu0 %v337
    %v566 = vpop.f32.mrf.mxu0
    %v567 = vadd.f32 %v101, %v566
    %v568 = vpop.f32.mrf.mxu0
    %v569 = vpop.f32.mrf.mxu0
    %v570 = vadd.f32 %v101, %v569
    %v571 = vpop.f32.mrf.mxu0
    %572 = vmatprep.mubr.bf16.mxu0 0
    %573 = vmatmul.mubr.bf16.gmra.mxu0 %v340
    %v574 = vpop.f32.mrf.mxu0
    %v575 = vadd.f32 %v101, %v574
    %v576 = vpop.f32.mrf.mxu0
    %v577 = vpop.f32.mrf.mxu0
    %v578 = vadd.f32 %v101, %v577
    %v579 = vpop.f32.mrf.mxu0
    %580 = vmatprep.mubr.bf16.mxu0 0
    %581 = vmatmul.mubr.bf16.gmra.mxu0 %v343
    %v582 = vpop.f32.mrf.mxu0
    %v583 = vadd.f32 %v101, %v582
    %v584 = vpop.f32.mrf.mxu0
    %v585 = vpop.f32.mrf.mxu0
    %v586 = vadd.f32 %v101, %v585
    %v587 = vpop.f32.mrf.mxu0
    %588 = vmatprep.mubr.bf16.mxu0 0
    %589 = vmatmul.mubr.bf16.gmra.mxu0 %v346
    %v590 = vpop.f32.mrf.mxu0
    %v591 = vadd.f32 %v101, %v590
    %v592 = vpop.f32.mrf.mxu0
    %v593 = vpop.f32.mrf.mxu0
    %v594 = vadd.f32 %v101, %v593
    %v595 = vpop.f32.mrf.mxu0
    %596 = vmatprep.mubr.bf16.mxu0 0
    %597 = vmatmul.mubr.bf16.gmra.mxu0 %v349
    %v598 = vpop.f32.mrf.mxu0
    %v599 = vadd.f32 %v101, %v598
    %v600 = vpop.f32.mrf.mxu0
    %v601 = vpop.f32.mrf.mxu0
    %v602 = vadd.f32 %v101, %v601
    %v603 = vpop.f32.mrf.mxu0
    %604 = vmatprep.mubr.bf16.mxu0 0
    %605 = vmatmul.mubr.bf16.gmra.mxu0 %v352
    %v606 = vpop.f32.mrf.mxu0
    %v607 = vadd.f32 %v101, %v606
    %v608 = vpop.f32.mrf.mxu0
    %v609 = vpop.f32.mrf.mxu0
    %v610 = vadd.f32 %v101, %v609
    %v611 = vpop.f32.mrf.mxu0
    %612 = vmatprep.mubr.bf16.mxu0 0
    %613 = vmatmul.mubr.bf16.gmra.mxu0 %v355
    %v614 = vpop.f32.mrf.mxu0
    %v615 = vadd.f32 %v101, %v614
    %v616 = vpop.f32.mrf.mxu0
    %v617 = vpop.f32.mrf.mxu0
    %v618 = vadd.f32 %v101, %v617
    %v619 = vpop.f32.mrf.mxu0
    %620 = vmatprep.mubr.bf16.mxu0 0
    %621 = vmatmul.mubr.bf16.gmra.mxu0 %v358
    %v622 = vpop.f32.mrf.mxu0
    %v623 = vadd.f32 %v101, %v622
    %v624 = vpop.f32.mrf.mxu0
    %v625 = vpop.f32.mrf.mxu0
    %v626 = vadd.f32 %v101, %v625
    %v627 = vpop.f32.mrf.mxu0
    %628 = vmatprep.mubr.bf16.mxu0 0
    %629 = vmatmul.mubr.bf16.gmra.mxu0 %v361
    %v630 = vpop.f32.mrf.mxu0
    %v631 = vadd.f32 %v101, %v630
    %v632 = vpop.f32.mrf.mxu0
    %v633 = vpop.f32.mrf.mxu0
    %v634 = vadd.f32 %v101, %v633
    %v635 = vpop.f32.mrf.mxu0
    %636 = vmatprep.mubr.bf16.mxu0 0
    %637 = vmatmul.mubr.bf16.gmra.mxu0 %v364
    %v638 = vpop.f32.mrf.mxu0
    %v639 = vadd.f32 %v101, %v638
    %v640 = vpop.f32.mrf.mxu0
    %v641 = vpop.f32.mrf.mxu0
    %v642 = vadd.f32 %v101, %v641
    %v643 = vpop.f32.mrf.mxu0
    %644 = vmatprep.mubr.bf16.mxu0 0
    %645 = vmatmul.mubr.bf16.gmra.mxu0 %v367
    %v646 = vpop.f32.mrf.mxu0
    %v647 = vadd.f32 %v101, %v646
    %v648 = vpop.f32.mrf.mxu0
    %v649 = vpop.f32.mrf.mxu0
    %v650 = vadd.f32 %v101, %v649
    %v651 = vpop.f32.mrf.mxu0
    %652 = vmatprep.mubr.bf16.mxu0 0
    %653 = vmatmul.mubr.bf16.gmra.mxu0 %v370
    %v654 = vpop.f32.mrf.mxu0
    %v655 = vadd.f32 %v101, %v654
    %v656 = vpop.f32.mrf.mxu0
    %v657 = vpop.f32.mrf.mxu0
    %v658 = vadd.f32 %v101, %v657
    %v659 = vpop.f32.mrf.mxu0
    %660 = vdwg.mxu0
    %v661 = vmax.f32 %v407, 0.0
    %v662 = vmax.f32 %v410, 0.0
    %v663 = vmax.f32 %v415, 0.0
    %v664 = vmax.f32 %v418, 0.0
    %v665 = vmax.f32 %v423, 0.0
    %v666 = vmax.f32 %v426, 0.0
    %v667 = vmax.f32 %v431, 0.0
    %v668 = vmax.f32 %v434, 0.0
    %v669 = vmax.f32 %v439, 0.0
    %v670 = vmax.f32 %v442, 0.0
    %v671 = vmax.f32 %v447, 0.0
    %v672 = vmax.f32 %v450, 0.0
    %v673 = vmax.f32 %v455, 0.0
    %v674 = vmax.f32 %v458, 0.0
    %v675 = vmax.f32 %v463, 0.0
    %v676 = vmax.f32 %v466, 0.0
    %v677 = vmax.f32 %v471, 0.0
    %v678 = vmax.f32 %v474, 0.0
    %v679 = vmax.f32 %v479, 0.0
    %v680 = vmax.f32 %v482, 0.0
    %v681 = vmax.f32 %v487, 0.0
    %v682 = vmax.f32 %v490, 0.0
    %v683 = vmax.f32 %v495, 0.0
    %v684 = vmax.f32 %v498, 0.0
    %v685 = vmax.f32 %v503, 0.0
    %v686 = vmax.f32 %v506, 0.0
    %v687 = vmax.f32 %v511, 0.0
    %v688 = vmax.f32 %v514, 0.0
    %v689 = vmax.f32 %v519, 0.0
    %v690 = vmax.f32 %v522, 0.0
    %v691 = vmax.f32 %v527, 0.0
    %v692 = vmax.f32 %v530, 0.0
    %v693 = vmax.f32 %v535, 0.0
    %v694 = vmax.f32 %v538, 0.0
    %v695 = vmax.f32 %v543, 0.0
    %v696 = vmax.f32 %v546, 0.0
    %v697 = vmax.f32 %v551, 0.0
    %v698 = vmax.f32 %v554, 0.0
    %v699 = vmax.f32 %v559, 0.0
    %v700 = vmax.f32 %v562, 0.0
    %v701 = vmax.f32 %v567, 0.0
    %v702 = vmax.f32 %v570, 0.0
    %v703 = vmax.f32 %v575, 0.0
    %v704 = vmax.f32 %v578, 0.0
    %v705 = vmax.f32 %v583, 0.0
    %v706 = vmax.f32 %v586, 0.0
    %v707 = vmax.f32 %v591, 0.0
    %v708 = vmax.f32 %v594, 0.0
    %v709 = vmax.f32 %v599, 0.0
    %v710 = vmax.f32 %v602, 0.0
    %v711 = vmax.f32 %v607, 0.0
    %v712 = vmax.f32 %v610, 0.0
    %v713 = vmax.f32 %v615, 0.0
    %v714 = vmax.f32 %v618, 0.0
    %v715 = vmax.f32 %v623, 0.0
    %v716 = vmax.f32 %v626, 0.0
    %v717 = vmax.f32 %v631, 0.0
    %v718 = vmax.f32 %v634, 0.0
    %v719 = vmax.f32 %v639, 0.0
    %v720 = vmax.f32 %v642, 0.0
    %v721 = vmax.f32 %v647, 0.0
    %v722 = vmax.f32 %v650, 0.0
    %v723 = vmax.f32 %v655, 0.0
    %v724 = vmax.f32 %v658, 0.0
    %v725 = vadd.f32 %v661, %v662
    %v726 = vadd.f32 %v725, %v663
    %v727 = vadd.f32 %v726, %v664
    %v728 = vadd.f32 %v727, %v665
    %v729 = vadd.f32 %v728, %v666
    %v730 = vadd.f32 %v729, %v667
    %v731 = vadd.f32 %v730, %v668
    %v732 = vadd.f32 %v731, %v669
    %v733 = vadd.f32 %v732, %v670
    %v734 = vadd.f32 %v733, %v671
    %v735 = vadd.f32 %v734, %v672
    %v736 = vadd.f32 %v735, %v673
    %v737 = vadd.f32 %v736, %v674
    %v738 = vadd.f32 %v737, %v675
    %v739 = vadd.f32 %v738, %v676
    %v740 = vadd.f32 %v739, %v677
    %v741 = vadd.f32 %v740, %v678
    %v742 = vadd.f32 %v741, %v679
    %v743 = vadd.f32 %v742, %v680
    %v744 = vadd.f32 %v743, %v681
    %v745 = vadd.f32 %v744, %v682
    %v746 = vadd.f32 %v745, %v683
    %v747 = vadd.f32 %v746, %v684
    %v748 = vadd.f32 %v747, %v685
    %v749 = vadd.f32 %v748, %v686
    %v750 = vadd.f32 %v749, %v687
    %v751 = vadd.f32 %v750, %v688
    %v752 = vadd.f32 %v751, %v689
    %v753 = vadd.f32 %v752, %v690
    %v754 = vadd.f32 %v753, %v691
    %v755 = vadd.f32 %v754, %v692
    %v756 = vrot.slane %v755, 4
    %v757 = vadd.f32 %v755, %v756
    %v758 = vrot.slane %v757, 2
    %v759 = vadd.f32 %v757, %v758
    %v760 = vrot.slane %v759, 1
    %v761 = vadd.f32 %v759, %v760
    %v762 = vadd.f32 %v693, %v694
    %v763 = vadd.f32 %v762, %v695
    %v764 = vadd.f32 %v763, %v696
    %v765 = vadd.f32 %v764, %v697
    %v766 = vadd.f32 %v765, %v698
    %v767 = vadd.f32 %v766, %v699
    %v768 = vadd.f32 %v767, %v700
    %v769 = vadd.f32 %v768, %v701
    %v770 = vadd.f32 %v769, %v702
    %v771 = vadd.f32 %v770, %v703
    %v772 = vadd.f32 %v771, %v704
    %v773 = vadd.f32 %v772, %v705
    %v774 = vadd.f32 %v773, %v706
    %v775 = vadd.f32 %v774, %v707
    %v776 = vadd.f32 %v775, %v708
    %v777 = vadd.f32 %v776, %v709
    %v778 = vadd.f32 %v777, %v710
    %v779 = vadd.f32 %v778, %v711
    %v780 = vadd.f32 %v779, %v712
    %v781 = vadd.f32 %v780, %v713
    %v782 = vadd.f32 %v781, %v714
    %v783 = vadd.f32 %v782, %v715
    %v784 = vadd.f32 %v783, %v716
    %v785 = vadd.f32 %v784, %v717
    %v786 = vadd.f32 %v785, %v718
    %v787 = vadd.f32 %v786, %v719
    %v788 = vadd.f32 %v787, %v720
    %v789 = vadd.f32 %v788, %v721
    %v790 = vadd.f32 %v789, %v722
    %v791 = vadd.f32 %v790, %v723
    %v792 = vadd.f32 %v791, %v724
    %v793 = vrot.slane %v792, 4
    %v794 = vadd.f32 %v792, %v793
    %v795 = vrot.slane %v794, 2
    %v796 = vadd.f32 %v794, %v795
    %v797 = vrot.slane %v796, 1
    %v798 = vadd.f32 %v796, %v797
    %v799 = vrcp.pop 256.0
    %v800 = vmul.f32 %v761, %v799
    %v801 = vmul.f32 %v798, %v799
    %v802 = vpack.c.bf16 %v800, %v800
    %v803 = vpack.c.bf16 %v801, %v801
    %v804 = vld [vmem:[%s3] sm:$0xf]
    %v805 = vld [vmem:[%s3 + $0x4] sm:$0xf]
    %v806 = vld [vmem:[%s3 + $0x8] sm:$0xf]
    %v807 = vld [vmem:[%s3 + $0xc] sm:$0xf]
    %v808 = vld [vmem:[%s3 + $0x10] sm:$0xf]
    %v809 = vld [vmem:[%s3 + $0x14] sm:$0xf]
    %v810 = vld [vmem:[%s3 + $0x18] sm:$0xf]
    %v811 = vld [vmem:[%s3 + $0x1c] sm:$0xf]
    %v812 = vld [vmem:[%s3 + $0x20] sm:$0xf]
    %v813 = vld [vmem:[%s3 + $0x24] sm:$0xf]
    %v814 = vld [vmem:[%s3 + $0x28] sm:$0xf]
    %v815 = vld [vmem:[%s3 + $0x2c] sm:$0xf]
    %v816 = vld [vmem:[%s3 + $0x30] sm:$0xf]
    %v817 = vld [vmem:[%s3 + $0x34] sm:$0xf]
    %v818 = vld [vmem:[%s3 + $0x38] sm:$0xf]
    %v819 = vld [vmem:[%s3 + $0x3c] sm:$0xf]
    %v820 = vld [vmem:[%s4] sm:$0x1]
    %v822 = vlaneseq
    %v823 = vshrl.u32 %v822, 7
    %v824 = vsub.s32 0, %v823
    %v825 = vrot.slane %v820, %v824
    %v829 = vunpack.c.l.b16 %v802
    %v830 = vunpack.c.l.b16 %v803
    %vm831 = vcmask 1041409
    %v832 = vsel %vm831, %v830, %v829
    %v833 = vpack.c.b16 %v832, %v832
    %v851 = vunpack.c.l.b16 %v804
    %v852 = vunpack.c.l.b16 %v805
    %v853 = vunpack.c.l.b16 %v806
    %v854 = vunpack.c.l.b16 %v807
    %v855 = vunpack.c.l.b16 %v808
    %v856 = vunpack.c.l.b16 %v809
    %v857 = vunpack.c.l.b16 %v810
    %v858 = vunpack.c.l.b16 %v811
    %v859 = vunpack.c.l.b16 %v812
    %v860 = vunpack.c.l.b16 %v813
    %v861 = vunpack.c.l.b16 %v814
    %v862 = vunpack.c.l.b16 %v815
    %v863 = vunpack.c.l.b16 %v816
    %v864 = vunpack.c.l.b16 %v817
    %v865 = vunpack.c.l.b16 %v818
    %v866 = vunpack.c.l.b16 %v819
    %v867 = vpack.c.b16 %v852, %v851
    %v868 = vpack.c.b16 %v854, %v853
    %v869 = vpack.c.b16 %v856, %v855
    %v870 = vpack.c.b16 %v858, %v857
    %v871 = vpack.c.b16 %v860, %v859
    %v872 = vpack.c.b16 %v862, %v861
    %v873 = vpack.c.b16 %v864, %v863
    %v874 = vpack.c.b16 %v866, %v865
    %883 = vmatprep.subr.bf16.mxu0 0
    %884 = vmatpush1.bf16.msra.mxu0 %v874
    %885 = vmatprep.subr.bf16.mxu0 0
    %886 = vmatpush1.bf16.msra.mxu0 %v873
    %887 = vmatprep.subr.bf16.mxu0 0
    %888 = vmatpush1.bf16.msra.mxu0 %v872
    %889 = vmatprep.subr.bf16.mxu0 0
    %890 = vmatpush1.bf16.msra.mxu0 %v871
    %891 = vmatprep.subr.bf16.mxu0 0
    %892 = vmatpush1.bf16.msra.mxu0 %v870
    %893 = vmatprep.subr.bf16.mxu0 0
    %894 = vmatpush1.bf16.msra.mxu0 %v869
    %895 = vmatprep.subr.bf16.mxu0 0
    %896 = vmatpush1.bf16.msra.mxu0 %v868
    %897 = vmatprep.subr.bf16.mxu0 0
    %898 = vmatpush1.bf16.msra.mxu0 %v867
    %899 = vmatprep.subr.bf16.mxu0 0
    %900 = vmatpush2.bf16.msra.mxu0 0
    %901 = vmatprep.subr.bf16.mxu0 0
    %902 = vmatpush2.bf16.msra.mxu0 0
    %903 = vmatprep.subr.bf16.mxu0 0
    %904 = vmatpush2.bf16.msra.mxu0 0
    %905 = vmatprep.subr.bf16.mxu0 0
    %906 = vmatpush2.bf16.msra.mxu0 0
    %907 = vmatprep.subr.bf16.mxu0 0
    %908 = vmatpush2.bf16.msra.mxu0 0
    %909 = vmatprep.subr.bf16.mxu0 0
    %910 = vmatpush2.bf16.msra.mxu0 0
    %911 = vmatprep.subr.bf16.mxu0 0
    %912 = vmatpush2.bf16.msra.mxu0 0
    %913 = vmatprep.subr.bf16.mxu0 0
    %914 = vmatpush2.bf16.msra.mxu0 0
    %915 = vmatprep.mubr.bf16.mxu0 0
    %916 = vmatmul.mubr.bf16.gmra.mxu0 %v833
    %v917 = vpop.f32.mrf.mxu0
    %v918 = vadd.f32 %v825, %v917
    %v919 = vpop.f32.mrf.mxu0
    %v920 = vpop.f32.mrf.mxu0
    %v921 = vpop.f32.mrf.mxu0
    %922 = vdwg.mxu0
    %v923 = vmax.f32 %v918, 0.0
    %v924 = vpack.c.bf16 %v923, %v923
    %v925 = vld [vmem:[%s5] sm:$0xf]
    %v926 = vld [vmem:[%s5 + $0x4] sm:$0xf]
    %v927 = vld [vmem:[%s5 + $0x8] sm:$0xf]
    %v928 = vld [vmem:[%s5 + $0xc] sm:$0xf]
    %v929 = vld [vmem:[%s5 + $0x10] sm:$0xf]
    %v930 = vld [vmem:[%s5 + $0x14] sm:$0xf]
    %v931 = vld [vmem:[%s5 + $0x18] sm:$0xf]
    %v932 = vld [vmem:[%s5 + $0x1c] sm:$0xf]
    %v933 = vld [vmem:[%s5 + $0x20] sm:$0xf]
    %v934 = vld [vmem:[%s5 + $0x24] sm:$0xf]
    %v935 = vld [vmem:[%s5 + $0x28] sm:$0xf]
    %v936 = vld [vmem:[%s5 + $0x2c] sm:$0xf]
    %v937 = vld [vmem:[%s5 + $0x30] sm:$0xf]
    %v938 = vld [vmem:[%s5 + $0x34] sm:$0xf]
    %v939 = vld [vmem:[%s5 + $0x38] sm:$0xf]
    %v940 = vld [vmem:[%s5 + $0x3c] sm:$0xf]
    %v941 = vld [vmem:[%s6] sm:$0x1]
    %v943 = vlaneseq
    %v944 = vshrl.u32 %v943, 7
    %v945 = vsub.s32 0, %v944
    %v946 = vrot.slane %v941, %v945
    %v964 = vunpack.c.l.b16 %v925
    %v965 = vunpack.c.l.b16 %v926
    %v966 = vunpack.c.l.b16 %v927
    %v967 = vunpack.c.l.b16 %v928
    %v968 = vunpack.c.l.b16 %v929
    %v969 = vunpack.c.l.b16 %v930
    %v970 = vunpack.c.l.b16 %v931
    %v971 = vunpack.c.l.b16 %v932
    %v972 = vunpack.c.l.b16 %v933
    %v973 = vunpack.c.l.b16 %v934
    %v974 = vunpack.c.l.b16 %v935
    %v975 = vunpack.c.l.b16 %v936
    %v976 = vunpack.c.l.b16 %v937
    %v977 = vunpack.c.l.b16 %v938
    %v978 = vunpack.c.l.b16 %v939
    %v979 = vunpack.c.l.b16 %v940
    %v980 = vpack.c.b16 %v965, %v964
    %v981 = vpack.c.b16 %v967, %v966
    %v982 = vpack.c.b16 %v969, %v968
    %v983 = vpack.c.b16 %v971, %v970
    %v984 = vpack.c.b16 %v973, %v972
    %v985 = vpack.c.b16 %v975, %v974
    %v986 = vpack.c.b16 %v977, %v976
    %v987 = vpack.c.b16 %v979, %v978
    %996 = vmatprep.subr.bf16.mxu0 0
    %997 = vmatpush1.bf16.msra.mxu0 %v987
    %998 = vmatprep.subr.bf16.mxu0 0
    %999 = vmatpush1.bf16.msra.mxu0 %v986
    %1000 = vmatprep.subr.bf16.mxu0 0
    %1001 = vmatpush1.bf16.msra.mxu0 %v985
    %1002 = vmatprep.subr.bf16.mxu0 0
    %1003 = vmatpush1.bf16.msra.mxu0 %v984
    %1004 = vmatprep.subr.bf16.mxu0 0
    %1005 = vmatpush1.bf16.msra.mxu0 %v983
    %1006 = vmatprep.subr.bf16.mxu0 0
    %1007 = vmatpush1.bf16.msra.mxu0 %v982
    %1008 = vmatprep.subr.bf16.mxu0 0
    %1009 = vmatpush1.bf16.msra.mxu0 %v981
    %1010 = vmatprep.subr.bf16.mxu0 0
    %1011 = vmatpush1.bf16.msra.mxu0 %v980
    %1012 = vmatprep.subr.bf16.mxu0 0
    %1013 = vmatpush2.bf16.msra.mxu0 0
    %1014 = vmatprep.subr.bf16.mxu0 0
    %1015 = vmatpush2.bf16.msra.mxu0 0
    %1016 = vmatprep.subr.bf16.mxu0 0
    %1017 = vmatpush2.bf16.msra.mxu0 0
    %1018 = vmatprep.subr.bf16.mxu0 0
    %1019 = vmatpush2.bf16.msra.mxu0 0
    %1020 = vmatprep.subr.bf16.mxu0 0
    %1021 = vmatpush2.bf16.msra.mxu0 0
    %1022 = vmatprep.subr.bf16.mxu0 0
    %1023 = vmatpush2.bf16.msra.mxu0 0
    %1024 = vmatprep.subr.bf16.mxu0 0
    %1025 = vmatpush2.bf16.msra.mxu0 0
    %1026 = vmatprep.subr.bf16.mxu0 0
    %1027 = vmatpush2.bf16.msra.mxu0 0
    %1028 = vmatprep.mubr.bf16.mxu0 0
    %1029 = vmatmul.mubr.bf16.gmra.mxu0 %v924
    %v1030 = vpop.f32.mrf.mxu0
    %v1031 = vadd.f32 %v946, %v1030
    %v1032 = vpop.f32.mrf.mxu0
    %v1033 = vpop.f32.mrf.mxu0
    %v1034 = vpop.f32.mrf.mxu0
    %1035 = vdwg.mxu0
    %1036 = vst [vmem:[#allocation2] sm:$0x3] %v1031
    // Predicated region
    $region30: #{tpu_custom_call.1} parent=1 // pred_check
      _
    $region31: #{tpu_custom_call.1} parent=1 // pred_check_branch
      %1038 = sbr.rel (0) target = $region33
    $region32: #{tpu_custom_call.1} parent=1 // pred_region
      %s1040 = ssub.s32 32, 32
      %1041 = vsyncadd [#allocation3], %s1040
      %s1043 = sshll.u32 [#allocation2], 4
      %s1044 = int_to_ptr.vmem [resolvable:$true] %s1043
      %1046 = dma.vmem_to_hbm [thread:$0]  %s1044, 32, %s7, [#allocation3]
    $region33: #{tpu_custom_call.1} parent=1 // pred_fallthru
      _
    // Predicated region
    $region34: #{tpu_custom_call.1} parent=1 // pred_check
      _
    $region35: #{tpu_custom_call.1} parent=1 // pred_check_branch
      %1048 = sbr.rel (0) target = $region37
    $region36: #{tpu_custom_call.1} parent=1 // pred_region
      %1049 = dma.done [#allocation3], 32
    $region37: #{tpu_custom_call.1} parent=1 // pred_fallthru
      _
    %1050 = vsyncpa [#allocation3], 1

</llo_original>
